<compile_context>
chip_gen: v5e
topology: v5e:2x2
jax: 0.10.0
libtpu: 0.0.40
codegen_flags: <defaults>
</compile_context>

<pallas_src>
import math
import functools

import jax
import jax.numpy as jnp
from jax.experimental import pallas as pl
from jax.experimental.pallas import tpu as pltpu


def _layer_norm(v, gamma, beta, eps=1e-5):
    mean = jnp.mean(v, axis=-1, keepdims=True)
    var = jnp.mean((v - mean) ** 2, axis=-1, keepdims=True)
    return (v - mean) * jax.lax.rsqrt(var + eps) * gamma + beta


def transformer_layer_kernel(
    x_ref,        # (1, L, E)   activations (native dtype)
    wqkv_ref,     # (1, E, 3Dh) per-head fused QKV weight^T (bf16, scale folded into Q)
    bqkv_ref,     # (1, 1, 3Dh) per-head fused QKV bias (f32, Q part pre-scaled)
    wo_ref,       # (1, Dh, E)  per-head slice of out_proj.weight^T (bf16)
    bo_ref,       # (1, E)      out_proj.bias (f32)
    qk_g_ref,     # (1, E)      qk_norm.weight
    qk_b_ref,     # (1, E)      qk_norm.bias
    n1_g_ref,     # (1, E)      norm1.weight
    n1_b_ref,     # (1, E)      norm1.bias
    w1_ref,       # (E, F)      feedforward[0].weight^T (bf16)
    b1_ref,       # (1, F)      feedforward[0].bias     (f32)
    w2_ref,       # (F, E)      feedforward[2].weight^T (bf16)
    b2_ref,       # (1, E)      feedforward[2].bias     (f32)
    n2_g_ref,     # (1, E)      norm2.weight
    n2_b_ref,     # (1, E)      norm2.bias
    o_ref,        # (1, L, E)   output (f32)
    acc_ref,      # (L, E)      VMEM f32 accumulator (out-projection over heads)
    *,
    head_dim: int,
):
    h = pl.program_id(1)
    num_heads = pl.num_programs(1)
    Dh = head_dim
    cdt = wqkv_ref.dtype                       # bf16 compute dtype (MXU)

    x_nat = x_ref[0]                           # (L, E) native dtype
    x_c = x_nat.astype(cdt)

    # Per-head fused QKV projection — one MXU matmul with N = 3*Dh.
    # The 1/sqrt(Dh) softmax scale is pre-folded into the Q weight/bias.
    qkv = jnp.dot(x_c, wqkv_ref[0], preferred_element_type=jnp.float32)
    qkv = qkv + bqkv_ref[0]                    # (L, 3Dh) f32
    q = qkv[:, 0:Dh].astype(cdt)
    k = qkv[:, Dh:2 * Dh].astype(cdt)
    v = qkv[:, 2 * Dh:3 * Dh].astype(cdt)

    # Scaled dot-product attention for this head.
    s = jnp.einsum("qd,kd->qk", q, k, preferred_element_type=jnp.float32)  # (L, L)
    s = s - jnp.max(s, axis=-1, keepdims=True)
    p = jnp.exp(s)
    inv_l = pl.reciprocal(jnp.sum(p, axis=-1, keepdims=True), approx=True)
    ctx = jnp.dot(p.astype(cdt), v, preferred_element_type=jnp.float32)    # (L, Dh)
    ctx = ctx * inv_l      # normalize the (L, Dh) context, not the (L, L) probs

    # Out-projection folded into the head loop: lane-dense full-E accumulate.
    @pl.when(h == 0)
    def _():
        acc_ref[...] = jnp.zeros_like(acc_ref)

    acc_ref[...] += jnp.dot(ctx.astype(cdt), wo_ref[0],
                            preferred_element_type=jnp.float32)

    # Epilogue on the final head.  qk_norm is applied to the attention output
    # (post out_proj), exactly as in the reference PyTorch forward.
    @pl.when(h == num_heads - 1)
    def _():
        attn = acc_ref[...] + bo_ref[...]
        attn = _layer_norm(attn, qk_g_ref[...], qk_b_ref[...])
        x_f32 = x_nat.astype(jnp.float32)
        # dropout1 -> identity; residual + norm1
        x1 = _layer_norm(x_f32 + attn, n1_g_ref[...], n1_b_ref[...])
        # Feedforward: Linear -> ReLU -> Linear (bf16 matmuls, f32 accumulate).
        h1 = jnp.dot(x1.astype(cdt), w1_ref[...],
                     preferred_element_type=jnp.float32) + b1_ref[...]
        h1 = jnp.maximum(h1, 0.0)
        ff = jnp.dot(h1.astype(cdt), w2_ref[...],
                     preferred_element_type=jnp.float32) + b2_ref[...]
        # dropout2 -> identity; residual + norm2
        out = _layer_norm(x1 + ff, n2_g_ref[...], n2_b_ref[...])
        o_ref[0] = out.astype(o_ref.dtype)


def prepare_params(params, *, num_heads, compute_dtype=jnp.bfloat16):
    """One-time transform of PyTorch-layout params into kernel layout.

    Hoisted out of the per-call path so repeated forward calls do not pay the
    f32 weight read + transpose + bf16 write traffic every time.
    """
    E = params["wo"].shape[0]
    F = params["w1"].shape[0]
    assert E % num_heads == 0, "embed_dim must be divisible by num_heads"
    H = num_heads
    Dh = E // H
    scale = 1.0 / math.sqrt(Dh)
    f32 = jnp.float32

    wq, wk, wv = (params["wqkv"][i * E:(i + 1) * E] for i in range(3))  # (E, E)

    def per_head_t(w):   # (E_out, E_in) -> (H, E_in, Dh)
        return jnp.transpose(w.reshape(H, Dh, E), (0, 2, 1))

    wqkv_h = jnp.concatenate(
        [per_head_t(wq) * scale, per_head_t(wk), per_head_t(wv)],
        axis=-1).astype(compute_dtype)                                   # (H, E, 3Dh)

    bq, bk, bv = (params["bqkv"][i * E:(i + 1) * E] for i in range(3))
    bqkv_h = jnp.concatenate(
        [(bq * scale).reshape(H, 1, Dh),
         bk.reshape(H, 1, Dh),
         bv.reshape(H, 1, Dh)], axis=-1).astype(f32)                     # (H, 1, 3Dh)

    wo_h = params["wo"].T.reshape(H, Dh, E).astype(compute_dtype)        # (H, Dh, E)

    prep = {
        "wqkv_h": wqkv_h,
        "bqkv_h": bqkv_h,
        "wo_h": wo_h,
        "bo": params["bo"].reshape(1, E).astype(f32),
        "qk_g": params["qk_g"].reshape(1, E).astype(f32),
        "qk_b": params["qk_b"].reshape(1, E).astype(f32),
        "n1_g": params["n1_g"].reshape(1, E).astype(f32),
        "n1_b": params["n1_b"].reshape(1, E).astype(f32),
        "w1t": params["w1"].T.astype(compute_dtype),                     # (E, F)
        "b1": params["b1"].reshape(1, F).astype(f32),
        "w2t": params["w2"].T.astype(compute_dtype),                     # (F, E)
        "b2": params["b2"].reshape(1, E).astype(f32),
        "n2_g": params["n2_g"].reshape(1, E).astype(f32),
        "n2_b": params["n2_b"].reshape(1, E).astype(f32),
    }
    meta = {"num_heads": H, "head_dim": Dh, "embed_dim": E, "ffn_dim": F}
    return prep, meta


def transformer_layer(x_lne, prep, meta):
    """x_lne: (L, N, E) — same layout as the PyTorch module (batch_first=False)."""
    H, Dh = meta["num_heads"], meta["head_dim"]
    E, F = meta["embed_dim"], meta["ffn_dim"]
    x = jnp.transpose(x_lne, (1, 0, 2))            # (B, L, E), native dtype
    B, L, _ = x.shape

    weight_args = (
        prep["wqkv_h"], prep["bqkv_h"], prep["wo_h"], prep["bo"],
        prep["qk_g"], prep["qk_b"], prep["n1_g"], prep["n1_b"],
        prep["w1t"], prep["b1"], prep["w2t"], prep["b2"],
        prep["n2_g"], prep["n2_b"],
    )

    def head_spec(a):      # streamed: one head block per reduction step
        return pl.BlockSpec((1,) + a.shape[1:], lambda b, h: (h, 0, 0))

    def resident_spec(a):  # constant index_map -> stays resident in VMEM
        nd = a.ndim
        return pl.BlockSpec(a.shape, lambda b, h, _nd=nd: (0,) * _nd)

    in_specs = [pl.BlockSpec((1, L, E), lambda b, h: (b, 0, 0))]
    in_specs += [head_spec(prep["wqkv_h"]), head_spec(prep["bqkv_h"]),
                 head_spec(prep["wo_h"])]
    in_specs += [resident_spec(a) for a in weight_args[3:]]

    # Roofline hints for XLA scheduling.
    flops = 2 * B * L * E * (4 * E + 2 * L + 2 * F)
    transcendentals = B * H * L * (L + 1) + 3 * B * L
    weight_bytes = sum(int(a.size) * a.dtype.itemsize for a in weight_args)
    io_bytes = int(x.size) * x.dtype.itemsize + B * L * E * 4

    # Scoped-VMEM budget, clamped to the device's physical capacity
    # (v7x: 64 MiB per TensorCore; v5e/v6e: 128 MiB).
    act_bytes = 4 * L * max(3 * E, F, L) * 4
    need = (2 * weight_bytes + 4 * L * E * x.dtype.itemsize
            + 8 * L * E * 4 + 8 * act_bytes)
    try:
        cap = int(pltpu.get_tpu_info().vmem_capacity_bytes)
    except Exception:
        cap = 64 * 2 ** 20
    vmem_limit = int(min(max(16 * 2 ** 20, need), (3 * cap) // 4))

    out = pl.pallas_call(
        functools.partial(transformer_layer_kernel, head_dim=Dh),
        out_shape=jax.ShapeDtypeStruct((B, L, E), jnp.float32),
        grid_spec=pltpu.PrefetchScalarGridSpec(
            num_scalar_prefetch=0,
            grid=(B, H),                            # batch parallel, heads = reduction
            in_specs=in_specs,
            out_specs=pl.BlockSpec((1, L, E), lambda b, h: (b, 0, 0)),
            scratch_shapes=[pltpu.VMEM((L, E), jnp.float32)],
        ),
        compiler_params=pltpu.CompilerParams(
            dimension_semantics=("parallel", "arbitrary"),
            vmem_limit_bytes=vmem_limit,
        ),
        cost_estimate=pl.CostEstimate(
            flops=int(flops),
            transcendentals=int(transcendentals),
            bytes_accessed=int(weight_bytes + io_bytes),
        ),
    )(x, *weight_args)

    return jnp.transpose(out, (1, 0, 2))            # back to (L, N, E)


def init_params(key, embed_dim, num_heads, dim_feedforward):
    E, F = embed_dim, dim_feedforward
    keys = jax.random.split(key, 8)
    s = 0.02
    return {
        "wqkv": s * jax.random.normal(keys[0], (3 * E, E), jnp.float32),
        "bqkv": s * jax.random.normal(keys[1], (3 * E,), jnp.float32),
        "wo": s * jax.random.normal(keys[2], (E, E), jnp.float32),
        "bo": s * jax.random.normal(keys[3], (E,), jnp.float32),
        "w1": s * jax.random.normal(keys[4], (F, E), jnp.float32),
        "b1": s * jax.random.normal(keys[5], (F,), jnp.float32),
        "w2": s * jax.random.normal(keys[6], (E, F), jnp.float32),
        "b2": s * jax.random.normal(keys[7], (E,), jnp.float32),
        "qk_g": jnp.ones((E,), jnp.float32),
        "qk_b": jnp.zeros((E,), jnp.float32),
        "n1_g": jnp.ones((E,), jnp.float32),
        "n1_b": jnp.zeros((E,), jnp.float32),
        "n2_g": jnp.ones((E,), jnp.float32),
        "n2_b": jnp.zeros((E,), jnp.float32),
    }


if __name__ == "__main__":
    seq, batch, embed = 8, 2, 32
    num_heads, dim_feedforward = 4, 64

    key = jax.random.PRNGKey(0)
    kx, kp = jax.random.split(key)
    x = jax.random.normal(kx, (seq, batch, embed), jnp.float32)   # (L, N, E)
    params = init_params(kp, embed, num_heads, dim_feedforward)

    # One-time weight relayout + bf16 cast (hoisted out of the forward path).
    prep, meta = prepare_params(params, num_heads=num_heads)
    prep = jax.tree_util.tree_map(jax.block_until_ready, prep)

    out = transformer_layer(x, prep, meta)
    jax.block_until_ready(out)
    assert out.shape == (seq, batch, embed)
    assert out.dtype == jnp.float32
    print("KERNEL_OK")
</pallas_src>

<mosaic_0001>
module attributes {stable_mosaic.version = 11 : i64} {
  func.func @transformer_layer_kernel(%arg0: i32, %arg1: i32, %arg2: memref<1x8x32xf32, #tpu.memory_space<vmem>>, %arg3: memref<1x32x24xbf16, #tpu.memory_space<vmem>>, %arg4: memref<1x1x24xf32, #tpu.memory_space<vmem>>, %arg5: memref<1x8x32xbf16, #tpu.memory_space<vmem>>, %arg6: memref<1x32xf32, #tpu.memory_space<vmem>>, %arg7: memref<1x32xf32, #tpu.memory_space<vmem>>, %arg8: memref<1x32xf32, #tpu.memory_space<vmem>>, %arg9: memref<1x32xf32, #tpu.memory_space<vmem>>, %arg10: memref<1x32xf32, #tpu.memory_space<vmem>>, %arg11: memref<32x64xbf16, #tpu.memory_space<vmem>>, %arg12: memref<1x64xf32, #tpu.memory_space<vmem>>, %arg13: memref<64x32xbf16, #tpu.memory_space<vmem>>, %arg14: memref<1x32xf32, #tpu.memory_space<vmem>>, %arg15: memref<1x32xf32, #tpu.memory_space<vmem>>, %arg16: memref<1x32xf32, #tpu.memory_space<vmem>>, %arg17: memref<1x8x32xf32, #tpu.memory_space<vmem>>, %arg18: memref<8x32xf32, #tpu.memory_space<vmem>>) attributes {dimension_semantics = [#tpu.dimension_semantics<parallel>, #tpu.dimension_semantics<arbitrary>], iteration_bounds = array<i64: 2, 4>, scalar_prefetch = 0 : i64, scratch_operands = 1 : i64, tpu.core_type = #tpu.core_type<tc>, window_params = [{transform_indices = @transform_0, window_bounds = array<i64: 1, 8, 32>}, {transform_indices = @transform_1, window_bounds = array<i64: 1, 32, 24>}, {transform_indices = @transform_2, window_bounds = array<i64: 1, 1, 24>}, {transform_indices = @transform_3, window_bounds = array<i64: 1, 8, 32>}, {pipeline_mode = #tpu.pipeline_mode<synchronous>, transform_indices = @transform_4, window_bounds = array<i64: 1, 32>}, {pipeline_mode = #tpu.pipeline_mode<synchronous>, transform_indices = @transform_5, window_bounds = array<i64: 1, 32>}, {pipeline_mode = #tpu.pipeline_mode<synchronous>, transform_indices = @transform_6, window_bounds = array<i64: 1, 32>}, {pipeline_mode = #tpu.pipeline_mode<synchronous>, transform_indices = @transform_7, window_bounds = array<i64: 1, 32>}, {pipeline_mode = #tpu.pipeline_mode<synchronous>, transform_indices = @transform_8, window_bounds = array<i64: 1, 32>}, {pipeline_mode = #tpu.pipeline_mode<synchronous>, transform_indices = @transform_9, window_bounds = array<i64: 32, 64>}, {pipeline_mode = #tpu.pipeline_mode<synchronous>, transform_indices = @transform_10, window_bounds = array<i64: 1, 64>}, {pipeline_mode = #tpu.pipeline_mode<synchronous>, transform_indices = @transform_11, window_bounds = array<i64: 64, 32>}, {pipeline_mode = #tpu.pipeline_mode<synchronous>, transform_indices = @transform_12, window_bounds = array<i64: 1, 32>}, {pipeline_mode = #tpu.pipeline_mode<synchronous>, transform_indices = @transform_13, window_bounds = array<i64: 1, 32>}, {pipeline_mode = #tpu.pipeline_mode<synchronous>, transform_indices = @transform_14, window_bounds = array<i64: 1, 32>}, {transform_indices = @transform_15, window_bounds = array<i64: 1, 8, 32>}]} {
    %c0 = arith.constant 0 : index
    %c0_0 = arith.constant 0 : index
    %c0_1 = arith.constant 0 : index
    %0 = vector.load %arg2[%c0, %c0_0, %c0_1] : memref<1x8x32xf32, #tpu.memory_space<vmem>>, vector<1x8x32xf32>
    %1 = vector.shape_cast %0 : vector<1x8x32xf32> to vector<8x32xf32>
    %2 = arith.truncf %1 : vector<8x32xf32> to vector<8x32xbf16>
    %c0_2 = arith.constant 0 : index
    %c0_3 = arith.constant 0 : index
    %c0_4 = arith.constant 0 : index
    %3 = vector.load %arg3[%c0_2, %c0_3, %c0_4] : memref<1x32x24xbf16, #tpu.memory_space<vmem>>, vector<1x32x24xbf16>
    %4 = vector.shape_cast %3 : vector<1x32x24xbf16> to vector<32x24xbf16>
    %cst = arith.constant dense<0.000000e+00> : vector<8x24xf32>
    %5 = tpu.matmul %2, %4, %cst {dimension_numbers = #tpu.dot_dimension_numbers<[1], [0], [0], [1], [0, 0, 1, 1], [], []>} : vector<8x32xbf16>, vector<32x24xbf16>, vector<8x24xf32> -> vector<8x24xf32>
    %c0_5 = arith.constant 0 : index
    %c0_6 = arith.constant 0 : index
    %c0_7 = arith.constant 0 : index
    %6 = vector.load %arg4[%c0_5, %c0_6, %c0_7] : memref<1x1x24xf32, #tpu.memory_space<vmem>>, vector<1x1x24xf32>
    %7 = vector.shape_cast %6 : vector<1x1x24xf32> to vector<1x24xf32>
    %8 = vector.broadcast %7 : vector<1x24xf32> to vector<8x24xf32>
    %9 = arith.addf %5, %8 : vector<8x24xf32>
    %10 = vector.extract_strided_slice %9 {offsets = [0, 0], sizes = [8, 8], strides = [1, 1]} : vector<8x24xf32> to vector<8x8xf32>
    %11 = arith.truncf %10 : vector<8x8xf32> to vector<8x8xbf16>
    %12 = vector.extract_strided_slice %9 {offsets = [0, 8], sizes = [8, 8], strides = [1, 1]} : vector<8x24xf32> to vector<8x8xf32>
    %13 = arith.truncf %12 : vector<8x8xf32> to vector<8x8xbf16>
    %14 = vector.extract_strided_slice %9 {offsets = [0, 16], sizes = [8, 8], strides = [1, 1]} : vector<8x24xf32> to vector<8x8xf32>
    %15 = arith.truncf %14 : vector<8x8xf32> to vector<8x8xbf16>
    "tpu.trace_start"() <{level = 10 : i32, message = "qd,kd->qk"}> : () -> ()
    %cst_8 = arith.constant dense<0.000000e+00> : vector<8x8xf32>
    %16 = tpu.matmul %11, %13, %cst_8 {dimension_numbers = #tpu.dot_dimension_numbers<[1], [1], [0], [0], [0, 0, 1, 0], [], []>} : vector<8x8xbf16>, vector<8x8xbf16>, vector<8x8xf32> -> vector<8x8xf32>
    "tpu.trace_stop"() : () -> ()
    %cst_9 = arith.constant dense<0xFF800000> : vector<8xf32>
    %17 = vector.multi_reduction <maximumf>, %16, %cst_9 [1] : vector<8x8xf32> to vector<8xf32>
    %18 = vector.shape_cast %17 : vector<8xf32> to vector<8x1xf32>
    %19 = vector.broadcast %18 : vector<8x1xf32> to vector<8x8xf32>
    %20 = arith.subf %16, %19 : vector<8x8xf32>
    %21 = math.exp %20 : vector<8x8xf32>
    %cst_10 = arith.constant dense<0.000000e+00> : vector<8xf32>
    %22 = vector.multi_reduction <add>, %21, %cst_10 [1] : vector<8x8xf32> to vector<8xf32>
    %23 = vector.shape_cast %22 : vector<8xf32> to vector<8x1xf32>
    %24 = tpu.reciprocal %23 {approx = true} : vector<8x1xf32> -> vector<8x1xf32>
    %25 = arith.truncf %21 : vector<8x8xf32> to vector<8x8xbf16>
    %cst_11 = arith.constant dense<0.000000e+00> : vector<8x8xf32>
    %26 = tpu.matmul %25, %15, %cst_11 {dimension_numbers = #tpu.dot_dimension_numbers<[1], [0], [0], [1], [0, 0, 1, 1], [], []>} : vector<8x8xbf16>, vector<8x8xbf16>, vector<8x8xf32> -> vector<8x8xf32>
    %27 = vector.broadcast %24 : vector<8x1xf32> to vector<8x8xf32>
    %28 = arith.mulf %26, %27 : vector<8x8xf32>
    %c0_i32 = arith.constant 0 : i32
    %29 = arith.cmpi eq, %arg1, %c0_i32 : i32
    %30 = arith.extui %29 : i1 to i32
    %c0_i32_12 = arith.constant 0 : i32
    %31 = arith.cmpi ne, %30, %c0_i32_12 : i32
    scf.if %31 {
      %cst_22 = arith.constant 0.000000e+00 : f32
      %42 = vector.broadcast %cst_22 : f32 to vector<8x32xf32>
      %c0_23 = arith.constant 0 : index
      %c0_24 = arith.constant 0 : index
      %43 = vector.load %arg18[%c0_23, %c0_24] : memref<8x32xf32, #tpu.memory_space<vmem>>, vector<8x32xf32>
      tpu.vector_store %arg18[%c0_23, %c0_24], %42 {strides = array<i32>} : memref<8x32xf32, #tpu.memory_space<vmem>>, vector<8x32xf32>,
    } else {
    }
    %c0_13 = arith.constant 0 : index
    %c0_14 = arith.constant 0 : index
    %32 = vector.load %arg18[%c0_13, %c0_14] : memref<8x32xf32, #tpu.memory_space<vmem>>, vector<8x32xf32>
    %33 = arith.truncf %28 : vector<8x8xf32> to vector<8x8xbf16>
    %c0_15 = arith.constant 0 : index
    %c0_16 = arith.constant 0 : index
    %c0_17 = arith.constant 0 : index
    %34 = vector.load %arg5[%c0_15, %c0_16, %c0_17] : memref<1x8x32xbf16, #tpu.memory_space<vmem>>, vector<1x8x32xbf16>
    %35 = vector.shape_cast %34 : vector<1x8x32xbf16> to vector<8x32xbf16>
    %cst_18 = arith.constant dense<0.000000e+00> : vector<8x32xf32>
    %36 = tpu.matmul %33, %35, %cst_18 {dimension_numbers = #tpu.dot_dimension_numbers<[1], [0], [0], [1], [0, 0, 1, 1], [], []>} : vector<8x8xbf16>, vector<8x32xbf16>, vector<8x32xf32> -> vector<8x32xf32>
    %37 = arith.addf %32, %36 : vector<8x32xf32>
    %c0_19 = arith.constant 0 : index
    %c0_20 = arith.constant 0 : index
    %38 = vector.load %arg18[%c0_19, %c0_20] : memref<8x32xf32, #tpu.memory_space<vmem>>, vector<8x32xf32>
    tpu.vector_store %arg18[%c0_19, %c0_20], %37 {strides = array<i32>} : memref<8x32xf32, #tpu.memory_space<vmem>>, vector<8x32xf32>,
    %c3_i32 = arith.constant 3 : i32
    %39 = arith.cmpi eq, %arg1, %c3_i32 : i32
    %40 = arith.extui %39 : i1 to i32
    %c0_i32_21 = arith.constant 0 : i32
    %41 = arith.cmpi ne, %40, %c0_i32_21 : i32
    scf.if %41 {
      %c0_22 = arith.constant 0 : index
      %c0_23 = arith.constant 0 : index
      %42 = vector.load %arg18[%c0_22, %c0_23] : memref<8x32xf32, #tpu.memory_space<vmem>>, vector<8x32xf32>
      %c0_24 = arith.constant 0 : index
      %c0_25 = arith.constant 0 : index
      %43 = vector.load %arg6[%c0_24, %c0_25] : memref<1x32xf32, #tpu.memory_space<vmem>>, vector<1x32xf32>
      %44 = vector.broadcast %43 : vector<1x32xf32> to vector<8x32xf32>
      %45 = arith.addf %42, %44 : vector<8x32xf32>
      %c0_26 = arith.constant 0 : index
      %c0_27 = arith.constant 0 : index
      %46 = vector.load %arg7[%c0_26, %c0_27] : memref<1x32xf32, #tpu.memory_space<vmem>>, vector<1x32xf32>
      %c0_28 = arith.constant 0 : index
      %c0_29 = arith.constant 0 : index
      %47 = vector.load %arg8[%c0_28, %c0_29] : memref<1x32xf32, #tpu.memory_space<vmem>>, vector<1x32xf32>
      %cst_30 = arith.constant dense<0.000000e+00> : vector<8xf32>
      %48 = vector.multi_reduction <add>, %45, %cst_30 [1] : vector<8x32xf32> to vector<8xf32>
      %49 = vector.shape_cast %48 : vector<8xf32> to vector<8x1xf32>
      %cst_31 = arith.constant 3.200000e+01 : f32
      %50 = vector.broadcast %cst_31 : f32 to vector<8x1xf32>
      %51 = arith.divf %49, %50 : vector<8x1xf32>
      %52 = vector.broadcast %51 : vector<8x1xf32> to vector<8x32xf32>
      %53 = arith.subf %45, %52 : vector<8x32xf32>
      %54 = arith.mulf %53, %53 : vector<8x32xf32>
      %cst_32 = arith.constant dense<0.000000e+00> : vector<8xf32>
      %55 = vector.multi_reduction <add>, %54, %cst_32 [1] : vector<8x32xf32> to vector<8xf32>
      %56 = vector.shape_cast %55 : vector<8xf32> to vector<8x1xf32>
      %cst_33 = arith.constant 3.200000e+01 : f32
      %57 = vector.broadcast %cst_33 : f32 to vector<8x1xf32>
      %58 = arith.divf %56, %57 : vector<8x1xf32>
      %59 = vector.broadcast %51 : vector<8x1xf32> to vector<8x32xf32>
      %60 = arith.subf %45, %59 : vector<8x32xf32>
      %cst_34 = arith.constant 9.99999974E-6 : f32
      %61 = vector.broadcast %cst_34 : f32 to vector<8x1xf32>
      %62 = arith.addf %58, %61 : vector<8x1xf32>
      %63 = math.rsqrt %62 : vector<8x1xf32>
      %64 = vector.broadcast %63 : vector<8x1xf32> to vector<8x32xf32>
      %65 = arith.mulf %60, %64 : vector<8x32xf32>
      %66 = vector.broadcast %46 : vector<1x32xf32> to vector<8x32xf32>
      %67 = arith.mulf %65, %66 : vector<8x32xf32>
      %68 = vector.broadcast %47 : vector<1x32xf32> to vector<8x32xf32>
      %69 = arith.addf %67, %68 : vector<8x32xf32>
      %70 = arith.addf %1, %69 : vector<8x32xf32>
      %c0_35 = arith.constant 0 : index
      %c0_36 = arith.constant 0 : index
      %71 = vector.load %arg9[%c0_35, %c0_36] : memref<1x32xf32, #tpu.memory_space<vmem>>, vector<1x32xf32>
      %c0_37 = arith.constant 0 : index
      %c0_38 = arith.constant 0 : index
      %72 = vector.load %arg10[%c0_37, %c0_38] : memref<1x32xf32, #tpu.memory_space<vmem>>, vector<1x32xf32>
      %cst_39 = arith.constant dense<0.000000e+00> : vector<8xf32>
      %73 = vector.multi_reduction <add>, %70, %cst_39 [1] : vector<8x32xf32> to vector<8xf32>
      %74 = vector.shape_cast %73 : vector<8xf32> to vector<8x1xf32>
      %cst_40 = arith.constant 3.200000e+01 : f32
      %75 = vector.broadcast %cst_40 : f32 to vector<8x1xf32>
      %76 = arith.divf %74, %75 : vector<8x1xf32>
      %77 = vector.broadcast %76 : vector<8x1xf32> to vector<8x32xf32>
      %78 = arith.subf %70, %77 : vector<8x32xf32>
      %79 = arith.mulf %78, %78 : vector<8x32xf32>
      %cst_41 = arith.constant dense<0.000000e+00> : vector<8xf32>
      %80 = vector.multi_reduction <add>, %79, %cst_41 [1] : vector<8x32xf32> to vector<8xf32>
      %81 = vector.shape_cast %80 : vector<8xf32> to vector<8x1xf32>
      %cst_42 = arith.constant 3.200000e+01 : f32
      %82 = vector.broadcast %cst_42 : f32 to vector<8x1xf32>
      %83 = arith.divf %81, %82 : vector<8x1xf32>
      %84 = vector.broadcast %76 : vector<8x1xf32> to vector<8x32xf32>
      %85 = arith.subf %70, %84 : vector<8x32xf32>
      %cst_43 = arith.constant 9.99999974E-6 : f32
      %86 = vector.broadcast %cst_43 : f32 to vector<8x1xf32>
      %87 = arith.addf %83, %86 : vector<8x1xf32>
      %88 = math.rsqrt %87 : vector<8x1xf32>
      %89 = vector.broadcast %88 : vector<8x1xf32> to vector<8x32xf32>
      %90 = arith.mulf %85, %89 : vector<8x32xf32>
      %91 = vector.broadcast %71 : vector<1x32xf32> to vector<8x32xf32>
      %92 = arith.mulf %90, %91 : vector<8x32xf32>
      %93 = vector.broadcast %72 : vector<1x32xf32> to vector<8x32xf32>
      %94 = arith.addf %92, %93 : vector<8x32xf32>
      %95 = arith.truncf %94 : vector<8x32xf32> to vector<8x32xbf16>
      %c0_44 = arith.constant 0 : index
      %c0_45 = arith.constant 0 : index
      %96 = vector.load %arg11[%c0_44, %c0_45] : memref<32x64xbf16, #tpu.memory_space<vmem>>, vector<32x64xbf16>
      %cst_46 = arith.constant dense<0.000000e+00> : vector<8x64xf32>
      %97 = tpu.matmul %95, %96, %cst_46 {dimension_numbers = #tpu.dot_dimension_numbers<[1], [0], [0], [1], [0, 0, 1, 1], [], []>} : vector<8x32xbf16>, vector<32x64xbf16>, vector<8x64xf32> -> vector<8x64xf32>
      %c0_47 = arith.constant 0 : index
      %c0_48 = arith.constant 0 : index
      %98 = vector.load %arg12[%c0_47, %c0_48] : memref<1x64xf32, #tpu.memory_space<vmem>>, vector<1x64xf32>
      %99 = vector.broadcast %98 : vector<1x64xf32> to vector<8x64xf32>
      %100 = arith.addf %97, %99 : vector<8x64xf32>
      %cst_49 = arith.constant 0.000000e+00 : f32
      %101 = vector.broadcast %cst_49 : f32 to vector<8x64xf32>
      %102 = arith.maximumf %100, %101 : vector<8x64xf32>
      %103 = arith.truncf %102 : vector<8x64xf32> to vector<8x64xbf16>
      %c0_50 = arith.constant 0 : index
      %c0_51 = arith.constant 0 : index
      %104 = vector.load %arg13[%c0_50, %c0_51] : memref<64x32xbf16, #tpu.memory_space<vmem>>, vector<64x32xbf16>
      %cst_52 = arith.constant dense<0.000000e+00> : vector<8x32xf32>
      %105 = tpu.matmul %103, %104, %cst_52 {dimension_numbers = #tpu.dot_dimension_numbers<[1], [0], [0], [1], [0, 0, 1, 1], [], []>} : vector<8x64xbf16>, vector<64x32xbf16>, vector<8x32xf32> -> vector<8x32xf32>
      %c0_53 = arith.constant 0 : index
      %c0_54 = arith.constant 0 : index
      %106 = vector.load %arg14[%c0_53, %c0_54] : memref<1x32xf32, #tpu.memory_space<vmem>>, vector<1x32xf32>
      %107 = vector.broadcast %106 : vector<1x32xf32> to vector<8x32xf32>
      %108 = arith.addf %105, %107 : vector<8x32xf32>
      %109 = arith.addf %94, %108 : vector<8x32xf32>
      %c0_55 = arith.constant 0 : index
      %c0_56 = arith.constant 0 : index
      %110 = vector.load %arg15[%c0_55, %c0_56] : memref<1x32xf32, #tpu.memory_space<vmem>>, vector<1x32xf32>
      %c0_57 = arith.constant 0 : index
      %c0_58 = arith.constant 0 : index
      %111 = vector.load %arg16[%c0_57, %c0_58] : memref<1x32xf32, #tpu.memory_space<vmem>>, vector<1x32xf32>
      %cst_59 = arith.constant dense<0.000000e+00> : vector<8xf32>
      %112 = vector.multi_reduction <add>, %109, %cst_59 [1] : vector<8x32xf32> to vector<8xf32>
      %113 = vector.shape_cast %112 : vector<8xf32> to vector<8x1xf32>
      %cst_60 = arith.constant 3.200000e+01 : f32
      %114 = vector.broadcast %cst_60 : f32 to vector<8x1xf32>
      %115 = arith.divf %113, %114 : vector<8x1xf32>
      %116 = vector.broadcast %115 : vector<8x1xf32> to vector<8x32xf32>
      %117 = arith.subf %109, %116 : vector<8x32xf32>
      %118 = arith.mulf %117, %117 : vector<8x32xf32>
      %cst_61 = arith.constant dense<0.000000e+00> : vector<8xf32>
      %119 = vector.multi_reduction <add>, %118, %cst_61 [1] : vector<8x32xf32> to vector<8xf32>
      %120 = vector.shape_cast %119 : vector<8xf32> to vector<8x1xf32>
      %cst_62 = arith.constant 3.200000e+01 : f32
      %121 = vector.broadcast %cst_62 : f32 to vector<8x1xf32>
      %122 = arith.divf %120, %121 : vector<8x1xf32>
      %123 = vector.broadcast %115 : vector<8x1xf32> to vector<8x32xf32>
      %124 = arith.subf %109, %123 : vector<8x32xf32>
      %cst_63 = arith.constant 9.99999974E-6 : f32
      %125 = vector.broadcast %cst_63 : f32 to vector<8x1xf32>
      %126 = arith.addf %122, %125 : vector<8x1xf32>
      %127 = math.rsqrt %126 : vector<8x1xf32>
      %128 = vector.broadcast %127 : vector<8x1xf32> to vector<8x32xf32>
      %129 = arith.mulf %124, %128 : vector<8x32xf32>
      %130 = vector.broadcast %110 : vector<1x32xf32> to vector<8x32xf32>
      %131 = arith.mulf %129, %130 : vector<8x32xf32>
      %132 = vector.broadcast %111 : vector<1x32xf32> to vector<8x32xf32>
      %133 = arith.addf %131, %132 : vector<8x32xf32>
      %c0_64 = arith.constant 0 : index
      %c0_65 = arith.constant 0 : index
      %c0_66 = arith.constant 0 : index
      %134 = vector.load %arg17[%c0_64, %c0_65, %c0_66] : memref<1x8x32xf32, #tpu.memory_space<vmem>>, vector<1x8x32xf32>
      %135 = vector.shape_cast %134 : vector<1x8x32xf32> to vector<8x32xf32>
      %136 = vector.shape_cast %133 : vector<8x32xf32> to vector<1x8x32xf32>
      tpu.vector_store %arg17[%c0_64, %c0_65, %c0_66], %136 {strides = array<i32>} : memref<1x8x32xf32, #tpu.memory_space<vmem>>, vector<1x8x32xf32>,
    } else {
    }
    return
  }
  func.func @transform_0(%arg0: i32, %arg1: i32) -> (i32, i32, i32) {
    %c0_i32 = arith.constant 0 : i32
    %c0_i32_0 = arith.constant 0 : i32
    %c0_i32_1 = arith.constant 0 : i32
    return %arg0, %c0_i32, %c0_i32_0 : i32, i32, i32
  }
  func.func @transform_1(%arg0: i32, %arg1: i32) -> (i32, i32, i32) {
    %c0_i32 = arith.constant 0 : i32
    %c0_i32_0 = arith.constant 0 : i32
    %c0_i32_1 = arith.constant 0 : i32
    return %arg1, %c0_i32, %c0_i32_0 : i32, i32, i32
  }
  func.func @transform_2(%arg0: i32, %arg1: i32) -> (i32, i32, i32) {
    %c0_i32 = arith.constant 0 : i32
    %c0_i32_0 = arith.constant 0 : i32
    %c0_i32_1 = arith.constant 0 : i32
    return %arg1, %c0_i32, %c0_i32_0 : i32, i32, i32
  }
  func.func @transform_3(%arg0: i32, %arg1: i32) -> (i32, i32, i32) {
    %c0_i32 = arith.constant 0 : i32
    %c0_i32_0 = arith.constant 0 : i32
    %c0_i32_1 = arith.constant 0 : i32
    return %arg1, %c0_i32, %c0_i32_0 : i32, i32, i32
  }
  func.func @transform_4(%arg0: i32, %arg1: i32) -> (i32, i32) {
    %c0_i32 = arith.constant 0 : i32
    %c0_i32_0 = arith.constant 0 : i32
    %c0_i32_1 = arith.constant 0 : i32
    return %c0_i32, %c0_i32_0 : i32, i32
  }
  func.func @transform_5(%arg0: i32, %arg1: i32) -> (i32, i32) {
    %c0_i32 = arith.constant 0 : i32
    %c0_i32_0 = arith.constant 0 : i32
    %c0_i32_1 = arith.constant 0 : i32
    return %c0_i32, %c0_i32_0 : i32, i32
  }
  func.func @transform_6(%arg0: i32, %arg1: i32) -> (i32, i32) {
    %c0_i32 = arith.constant 0 : i32
    %c0_i32_0 = arith.constant 0 : i32
    %c0_i32_1 = arith.constant 0 : i32
    return %c0_i32, %c0_i32_0 : i32, i32
  }
  func.func @transform_7(%arg0: i32, %arg1: i32) -> (i32, i32) {
    %c0_i32 = arith.constant 0 : i32
    %c0_i32_0 = arith.constant 0 : i32
    %c0_i32_1 = arith.constant 0 : i32
    return %c0_i32, %c0_i32_0 : i32, i32
  }
  func.func @transform_8(%arg0: i32, %arg1: i32) -> (i32, i32) {
    %c0_i32 = arith.constant 0 : i32
    %c0_i32_0 = arith.constant 0 : i32
    %c0_i32_1 = arith.constant 0 : i32
    return %c0_i32, %c0_i32_0 : i32, i32
  }
  func.func @transform_9(%arg0: i32, %arg1: i32) -> (i32, i32) {
    %c0_i32 = arith.constant 0 : i32
    %c0_i32_0 = arith.constant 0 : i32
    %c0_i32_1 = arith.constant 0 : i32
    return %c0_i32, %c0_i32_0 : i32, i32
  }
  func.func @transform_10(%arg0: i32, %arg1: i32) -> (i32, i32) {
    %c0_i32 = arith.constant 0 : i32
    %c0_i32_0 = arith.constant 0 : i32
    %c0_i32_1 = arith.constant 0 : i32
    return %c0_i32, %c0_i32_0 : i32, i32
  }
  func.func @transform_11(%arg0: i32, %arg1: i32) -> (i32, i32) {
    %c0_i32 = arith.constant 0 : i32
    %c0_i32_0 = arith.constant 0 : i32
    %c0_i32_1 = arith.constant 0 : i32
    return %c0_i32, %c0_i32_0 : i32, i32
  }
  func.func @transform_12(%arg0: i32, %arg1: i32) -> (i32, i32) {
    %c0_i32 = arith.constant 0 : i32
    %c0_i32_0 = arith.constant 0 : i32
    %c0_i32_1 = arith.constant 0 : i32
    return %c0_i32, %c0_i32_0 : i32, i32
  }
  func.func @transform_13(%arg0: i32, %arg1: i32) -> (i32, i32) {
    %c0_i32 = arith.constant 0 : i32
    %c0_i32_0 = arith.constant 0 : i32
    %c0_i32_1 = arith.constant 0 : i32
    return %c0_i32, %c0_i32_0 : i32, i32
  }
  func.func @transform_14(%arg0: i32, %arg1: i32) -> (i32, i32) {
    %c0_i32 = arith.constant 0 : i32
    %c0_i32_0 = arith.constant 0 : i32
    %c0_i32_1 = arith.constant 0 : i32
    return %c0_i32, %c0_i32_0 : i32, i32
  }
  func.func @transform_15(%arg0: i32, %arg1: i32) -> (i32, i32, i32) {
    %c0_i32 = arith.constant 0 : i32
    %c0_i32_0 = arith.constant 0 : i32
    %c0_i32_1 = arith.constant 0 : i32
    return %arg0, %c0_i32, %c0_i32_0 : i32, i32, i32
  }
}

</mosaic_0001>

<llo_original>
// kernel: tpu_custom_call.1
$region0: #{tpu_custom_call.1}
  #allocation0 [shape = 'u32[]', space=smem, size = 0x4, offset = 0x4, fixed_abs, tag = 'smem constant byte address 0x4 - core index']
  #allocation1 [shape = 'u32[72,128]{1,0:T(1,128)}', space=vmem, size = 0x9000, scoped, tag = 'internal scratch']
  #allocation2 [shape = 'f32[8,32]{1,0:T(8,128)}', space=vmem, size = 0x1000, scoped, tag = 'scratch operand']
  %s0 = inlined_call_operand.vmem [shape: f32[2,8,32], index: 0, kind: input, shape index: {}]
  %s1 = inlined_call_operand.vmem [shape: bf16[4,32,24], index: 1, kind: input, shape index: {}]
  %s2 = inlined_call_operand.vmem [shape: f32[4,1,24], index: 2, kind: input, shape index: {}]
  %s3 = inlined_call_operand.vmem [shape: bf16[4,8,32], index: 3, kind: input, shape index: {}]
  %s4 = inlined_call_operand.vmem [shape: f32[1,32], index: 4, kind: input, shape index: {}]
  %s5 = inlined_call_operand.vmem [shape: f32[1,32], index: 5, kind: input, shape index: {}]
  %s6 = inlined_call_operand.vmem [shape: f32[1,32], index: 6, kind: input, shape index: {}]
  %s7 = inlined_call_operand.vmem [shape: f32[1,32], index: 7, kind: input, shape index: {}]
  %s8 = inlined_call_operand.vmem [shape: f32[1,32], index: 8, kind: input, shape index: {}]
  %s9 = inlined_call_operand.vmem [shape: bf16[32,64], index: 9, kind: input, shape index: {}]
  %s10 = inlined_call_operand.vmem [shape: f32[1,64], index: 10, kind: input, shape index: {}]
  %s11 = inlined_call_operand.vmem [shape: bf16[64,32], index: 11, kind: input, shape index: {}]
  %s12 = inlined_call_operand.vmem [shape: f32[1,32], index: 12, kind: input, shape index: {}]
  %s13 = inlined_call_operand.vmem [shape: f32[1,32], index: 13, kind: input, shape index: {}]
  %s14 = inlined_call_operand.vmem [shape: f32[1,32], index: 14, kind: input, shape index: {}]
  %s15 = inlined_call_operand.hbm [shape: f32[2,8,32], index: 15, kind: output, shape index: {}]
  %s16 = sld [smem:[#allocation0]]
  $region101: #{tpu_custom_call.1} parent=0
    _
  %s18 = ssub.s32 1, %s16
  %s19 = scalar_select 0, %s18, %s16
  $region1: #{tpu_custom_call.1} parent=0
    #allocation3 [shape = 'u8[8192]{0}', space=vmem, size = 0x2000, scoped, tag = 'output window, operand 0']
    #allocation4 [shape = 's32[2]{0}', space=sflag, size = 0x8, scoped, tag = 'scoped memory for tpu_custom_call.1']
    %20 = vsyncpa [#allocation4], 0
    %s21 = scalar_lea.sflag [#allocation4], 1
    %22 = vsyncpa %s21, 0
    loop: start=0, step=1, limit=10
    $region2: #{tpu_custom_call.1} parent=1 // loop_pre_header
      _
    $region3: #{tpu_custom_call.1} parent=1 // loop_header
      %s24 = sphi 0, %s28
      %p25 = scmp.ge.s32.totalorder %s24, 10
      %s31 = sphi 0, %s43
      %s32 = sphi 0, %s39
      %s33 = sphi 0, %s31
      %s34 = sphi 0, %s32
      %s35 = sphi 0, %s33
      %s36 = sphi 0, %s34
      %s46 = sphi 0, %s48
      %s49 = sphi 0, %s46
      %s50 = sphi 0, %s49
      %s66 = sphi 0, %s50
      %s72 = sphi 0, %s74
      %s75 = sphi 0, %s72
      %s76 = sphi 0, %s75
      %s92 = sphi 0, %s76
      %s98 = sphi 0, %s100
      %s101 = sphi 0, %s98
      %s102 = sphi 0, %s101
      %s118 = sphi 0, %s102
      %s124 = sphi 0, %s126
      %s127 = sphi 0, %s124
      %s128 = sphi 0, %s127
      %s144 = sphi 0, %s128
      %s148 = sphi 0, %s148
      %s150 = sphi 0, %s148
      %s151 = sphi 0, %s150
      %s165 = sphi 0, %s151
      %s169 = sphi 0, %s169
      %s171 = sphi 0, %s169
      %s172 = sphi 0, %s171
      %s186 = sphi 0, %s172
      %s190 = sphi 0, %s190
      %s192 = sphi 0, %s190
      %s193 = sphi 0, %s192
      %s207 = sphi 0, %s193
      %s211 = sphi 0, %s211
      %s213 = sphi 0, %s211
      %s214 = sphi 0, %s213
      %s228 = sphi 0, %s214
      %s232 = sphi 0, %s232
      %s234 = sphi 0, %s232
      %s235 = sphi 0, %s234
      %s249 = sphi 0, %s235
      %s253 = sphi 0, %s253
      %s255 = sphi 0, %s253
      %s256 = sphi 0, %s255
      %s270 = sphi 0, %s256
      %s274 = sphi 0, %s274
      %s276 = sphi 0, %s274
      %s277 = sphi 0, %s276
      %s291 = sphi 0, %s277
      %s295 = sphi 0, %s295
      %s297 = sphi 0, %s295
      %s298 = sphi 0, %s297
      %s312 = sphi 0, %s298
      %s316 = sphi 0, %s316
      %s318 = sphi 0, %s316
      %s319 = sphi 0, %s318
      %s333 = sphi 0, %s319
      %s337 = sphi 0, %s337
      %s339 = sphi 0, %s337
      %s340 = sphi 0, %s339
      %s354 = sphi 0, %s340
      %s358 = sphi 0, %s358
      %s360 = sphi 0, %s358
      %s361 = sphi 0, %s360
      %s375 = sphi 0, %s361
      %s381 = sphi 0, %s383
      %s384 = sphi 0, %s381
      %s385 = sphi 0, %s384
      %s401 = sphi 0, %s385
    $region4: #{tpu_custom_call.1} parent=1 // loop_header_branch
      %27 = sbr.rel (%p25) target = $region8
    $region5: #{tpu_custom_call.1} parent=1 // loop_body
      %s29 = ssub.s32 %s24, 1
      %s30 = ssub.s32 %s24, 2
      %s37 = sadd.s32 1, %s32
      %p38 = scmp.ge.s32.totalorder %s37, 4
      %s39 = scalar_select %p38, 0, %s37
      %s40 = sadd.s32 1, %s31
      %s41 = scalar_select %p38, %s40, %s31
      %p42 = scmp.ge.s32.totalorder %s41, 2
      %s43 = scalar_select %p42, 0, %s41
      %s44 = ssub.s32 %s31, %s43
      %p45 = scmp.eq.s32.totalorder %s44, 0
      %s47 = sadd.s32 %s46, 1
      %s48 = scalar_select %p45, %s46, %s47
      %p51 = pneg %p45
      %p52 = scmp.eq.s32.totalorder %s24, 7
      %p53 = por %p51, %p52
      %p54 = scmp.ne.s32.totalorder %s46, %s49
      %p55 = scmp.eq.s32.totalorder %s24, 0
      %p56 = por %p54, %p55
      %p57 = scmp.ne.s32.totalorder %s46, %s49
      %p58 = scmp.eq.s32.totalorder %s29, 7
      %p59 = por %p57, %p58
      %p60 = scmp.ne.s32.totalorder %s49, %s50
      %p61 = scmp.eq.s32.totalorder %s29, 0
      %p62 = por %p60, %p61
      %p63 = scmp.ne.s32.totalorder %s49, %s50
      %p64 = scmp.eq.s32.totalorder %s30, 7
      %p65 = por %p63, %p64
      %p67 = scmp.ne.s32.totalorder %s50, %s66
      %p68 = scmp.eq.s32.totalorder %s30, 0
      %p69 = por %p67, %p68
      %s70 = ssub.s32 %s32, %s39
      %p71 = scmp.eq.s32.totalorder %s70, 0
      %s73 = sadd.s32 %s72, 1
      %s74 = scalar_select %p71, %s72, %s73
      %p77 = pneg %p71
      %p78 = scmp.eq.s32.totalorder %s24, 7
      %p79 = por %p77, %p78
      %p80 = scmp.ne.s32.totalorder %s72, %s75
      %p81 = scmp.eq.s32.totalorder %s24, 0
      %p82 = por %p80, %p81
      %p83 = scmp.ne.s32.totalorder %s72, %s75
      %p84 = scmp.eq.s32.totalorder %s29, 7
      %p85 = por %p83, %p84
      %p86 = scmp.ne.s32.totalorder %s75, %s76
      %p87 = scmp.eq.s32.totalorder %s29, 0
      %p88 = por %p86, %p87
      %p89 = scmp.ne.s32.totalorder %s75, %s76
      %p90 = scmp.eq.s32.totalorder %s30, 7
      %p91 = por %p89, %p90
      %p93 = scmp.ne.s32.totalorder %s76, %s92
      %p94 = scmp.eq.s32.totalorder %s30, 0
      %p95 = por %p93, %p94
      %s96 = ssub.s32 %s32, %s39
      %p97 = scmp.eq.s32.totalorder %s96, 0
      %s99 = sadd.s32 %s98, 1
      %s100 = scalar_select %p97, %s98, %s99
      %p103 = pneg %p97
      %p104 = scmp.eq.s32.totalorder %s24, 7
      %p105 = por %p103, %p104
      %p106 = scmp.ne.s32.totalorder %s98, %s101
      %p107 = scmp.eq.s32.totalorder %s24, 0
      %p108 = por %p106, %p107
      %p109 = scmp.ne.s32.totalorder %s98, %s101
      %p110 = scmp.eq.s32.totalorder %s29, 7
      %p111 = por %p109, %p110
      %p112 = scmp.ne.s32.totalorder %s101, %s102
      %p113 = scmp.eq.s32.totalorder %s29, 0
      %p114 = por %p112, %p113
      %p115 = scmp.ne.s32.totalorder %s101, %s102
      %p116 = scmp.eq.s32.totalorder %s30, 7
      %p117 = por %p115, %p116
      %p119 = scmp.ne.s32.totalorder %s102, %s118
      %p120 = scmp.eq.s32.totalorder %s30, 0
      %p121 = por %p119, %p120
      %s122 = ssub.s32 %s32, %s39
      %p123 = scmp.eq.s32.totalorder %s122, 0
      %s125 = sadd.s32 %s124, 1
      %s126 = scalar_select %p123, %s124, %s125
      %p129 = pneg %p123
      %p130 = scmp.eq.s32.totalorder %s24, 7
      %p131 = por %p129, %p130
      %p132 = scmp.ne.s32.totalorder %s124, %s127
      %p133 = scmp.eq.s32.totalorder %s24, 0
      %p134 = por %p132, %p133
      %p135 = scmp.ne.s32.totalorder %s124, %s127
      %p136 = scmp.eq.s32.totalorder %s29, 7
      %p137 = por %p135, %p136
      %p138 = scmp.ne.s32.totalorder %s127, %s128
      %p139 = scmp.eq.s32.totalorder %s29, 0
      %p140 = por %p138, %p139
      %p141 = scmp.ne.s32.totalorder %s127, %s128
      %p142 = scmp.eq.s32.totalorder %s30, 7
      %p143 = por %p141, %p142
      %p145 = scmp.ne.s32.totalorder %s128, %s144
      %p146 = scmp.eq.s32.totalorder %s30, 0
      %p147 = por %p145, %p146
      %s149 = sadd.s32 %s148, 1
      %p152 = scmp.eq.s32.totalorder %s24, 7
      %p153 = scmp.ne.s32.totalorder %s148, %s150
      %p154 = scmp.eq.s32.totalorder %s24, 0
      %p155 = por %p153, %p154
      %p156 = scmp.ne.s32.totalorder %s148, %s150
      %p157 = scmp.eq.s32.totalorder %s29, 7
      %p158 = por %p156, %p157
      %p159 = scmp.ne.s32.totalorder %s150, %s151
      %p160 = scmp.eq.s32.totalorder %s29, 0
      %p161 = por %p159, %p160
      %p162 = scmp.ne.s32.totalorder %s150, %s151
      %p163 = scmp.eq.s32.totalorder %s30, 7
      %p164 = por %p162, %p163
      %p166 = scmp.ne.s32.totalorder %s151, %s165
      %p167 = scmp.eq.s32.totalorder %s30, 0
      %p168 = por %p166, %p167
      %s170 = sadd.s32 %s169, 1
      %p173 = scmp.eq.s32.totalorder %s24, 7
      %p174 = scmp.ne.s32.totalorder %s169, %s171
      %p175 = scmp.eq.s32.totalorder %s24, 0
      %p176 = por %p174, %p175
      %p177 = scmp.ne.s32.totalorder %s169, %s171
      %p178 = scmp.eq.s32.totalorder %s29, 7
      %p179 = por %p177, %p178
      %p180 = scmp.ne.s32.totalorder %s171, %s172
      %p181 = scmp.eq.s32.totalorder %s29, 0
      %p182 = por %p180, %p181
      %p183 = scmp.ne.s32.totalorder %s171, %s172
      %p184 = scmp.eq.s32.totalorder %s30, 7
      %p185 = por %p183, %p184
      %p187 = scmp.ne.s32.totalorder %s172, %s186
      %p188 = scmp.eq.s32.totalorder %s30, 0
      %p189 = por %p187, %p188
      %s191 = sadd.s32 %s190, 1
      %p194 = scmp.eq.s32.totalorder %s24, 7
      %p195 = scmp.ne.s32.totalorder %s190, %s192
      %p196 = scmp.eq.s32.totalorder %s24, 0
      %p197 = por %p195, %p196
      %p198 = scmp.ne.s32.totalorder %s190, %s192
      %p199 = scmp.eq.s32.totalorder %s29, 7
      %p200 = por %p198, %p199
      %p201 = scmp.ne.s32.totalorder %s192, %s193
      %p202 = scmp.eq.s32.totalorder %s29, 0
      %p203 = por %p201, %p202
      %p204 = scmp.ne.s32.totalorder %s192, %s193
      %p205 = scmp.eq.s32.totalorder %s30, 7
      %p206 = por %p204, %p205
      %p208 = scmp.ne.s32.totalorder %s193, %s207
      %p209 = scmp.eq.s32.totalorder %s30, 0
      %p210 = por %p208, %p209
      %s212 = sadd.s32 %s211, 1
      %p215 = scmp.eq.s32.totalorder %s24, 7
      %p216 = scmp.ne.s32.totalorder %s211, %s213
      %p217 = scmp.eq.s32.totalorder %s24, 0
      %p218 = por %p216, %p217
      %p219 = scmp.ne.s32.totalorder %s211, %s213
      %p220 = scmp.eq.s32.totalorder %s29, 7
      %p221 = por %p219, %p220
      %p222 = scmp.ne.s32.totalorder %s213, %s214
      %p223 = scmp.eq.s32.totalorder %s29, 0
      %p224 = por %p222, %p223
      %p225 = scmp.ne.s32.totalorder %s213, %s214
      %p226 = scmp.eq.s32.totalorder %s30, 7
      %p227 = por %p225, %p226
      %p229 = scmp.ne.s32.totalorder %s214, %s228
      %p230 = scmp.eq.s32.totalorder %s30, 0
      %p231 = por %p229, %p230
      %s233 = sadd.s32 %s232, 1
      %p236 = scmp.eq.s32.totalorder %s24, 7
      %p237 = scmp.ne.s32.totalorder %s232, %s234
      %p238 = scmp.eq.s32.totalorder %s24, 0
      %p239 = por %p237, %p238
      %p240 = scmp.ne.s32.totalorder %s232, %s234
      %p241 = scmp.eq.s32.totalorder %s29, 7
      %p242 = por %p240, %p241
      %p243 = scmp.ne.s32.totalorder %s234, %s235
      %p244 = scmp.eq.s32.totalorder %s29, 0
      %p245 = por %p243, %p244
      %p246 = scmp.ne.s32.totalorder %s234, %s235
      %p247 = scmp.eq.s32.totalorder %s30, 7
      %p248 = por %p246, %p247
      %p250 = scmp.ne.s32.totalorder %s235, %s249
      %p251 = scmp.eq.s32.totalorder %s30, 0
      %p252 = por %p250, %p251
      %s254 = sadd.s32 %s253, 1
      %p257 = scmp.eq.s32.totalorder %s24, 7
      %p258 = scmp.ne.s32.totalorder %s253, %s255
      %p259 = scmp.eq.s32.totalorder %s24, 0
      %p260 = por %p258, %p259
      %p261 = scmp.ne.s32.totalorder %s253, %s255
      %p262 = scmp.eq.s32.totalorder %s29, 7
      %p263 = por %p261, %p262
      %p264 = scmp.ne.s32.totalorder %s255, %s256
      %p265 = scmp.eq.s32.totalorder %s29, 0
      %p266 = por %p264, %p265
      %p267 = scmp.ne.s32.totalorder %s255, %s256
      %p268 = scmp.eq.s32.totalorder %s30, 7
      %p269 = por %p267, %p268
      %p271 = scmp.ne.s32.totalorder %s256, %s270
      %p272 = scmp.eq.s32.totalorder %s30, 0
      %p273 = por %p271, %p272
      %s275 = sadd.s32 %s274, 1
      %p278 = scmp.eq.s32.totalorder %s24, 7
      %p279 = scmp.ne.s32.totalorder %s274, %s276
      %p280 = scmp.eq.s32.totalorder %s24, 0
      %p281 = por %p279, %p280
      %p282 = scmp.ne.s32.totalorder %s274, %s276
      %p283 = scmp.eq.s32.totalorder %s29, 7
      %p284 = por %p282, %p283
      %p285 = scmp.ne.s32.totalorder %s276, %s277
      %p286 = scmp.eq.s32.totalorder %s29, 0
      %p287 = por %p285, %p286
      %p288 = scmp.ne.s32.totalorder %s276, %s277
      %p289 = scmp.eq.s32.totalorder %s30, 7
      %p290 = por %p288, %p289
      %p292 = scmp.ne.s32.totalorder %s277, %s291
      %p293 = scmp.eq.s32.totalorder %s30, 0
      %p294 = por %p292, %p293
      %s296 = sadd.s32 %s295, 1
      %p299 = scmp.eq.s32.totalorder %s24, 7
      %p300 = scmp.ne.s32.totalorder %s295, %s297
      %p301 = scmp.eq.s32.totalorder %s24, 0
      %p302 = por %p300, %p301
      %p303 = scmp.ne.s32.totalorder %s295, %s297
      %p304 = scmp.eq.s32.totalorder %s29, 7
      %p305 = por %p303, %p304
      %p306 = scmp.ne.s32.totalorder %s297, %s298
      %p307 = scmp.eq.s32.totalorder %s29, 0
      %p308 = por %p306, %p307
      %p309 = scmp.ne.s32.totalorder %s297, %s298
      %p310 = scmp.eq.s32.totalorder %s30, 7
      %p311 = por %p309, %p310
      %p313 = scmp.ne.s32.totalorder %s298, %s312
      %p314 = scmp.eq.s32.totalorder %s30, 0
      %p315 = por %p313, %p314
      %s317 = sadd.s32 %s316, 1
      %p320 = scmp.eq.s32.totalorder %s24, 7
      %p321 = scmp.ne.s32.totalorder %s316, %s318
      %p322 = scmp.eq.s32.totalorder %s24, 0
      %p323 = por %p321, %p322
      %p324 = scmp.ne.s32.totalorder %s316, %s318
      %p325 = scmp.eq.s32.totalorder %s29, 7
      %p326 = por %p324, %p325
      %p327 = scmp.ne.s32.totalorder %s318, %s319
      %p328 = scmp.eq.s32.totalorder %s29, 0
      %p329 = por %p327, %p328
      %p330 = scmp.ne.s32.totalorder %s318, %s319
      %p331 = scmp.eq.s32.totalorder %s30, 7
      %p332 = por %p330, %p331
      %p334 = scmp.ne.s32.totalorder %s319, %s333
      %p335 = scmp.eq.s32.totalorder %s30, 0
      %p336 = por %p334, %p335
      %s338 = sadd.s32 %s337, 1
      %p341 = scmp.eq.s32.totalorder %s24, 7
      %p342 = scmp.ne.s32.totalorder %s337, %s339
      %p343 = scmp.eq.s32.totalorder %s24, 0
      %p344 = por %p342, %p343
      %p345 = scmp.ne.s32.totalorder %s337, %s339
      %p346 = scmp.eq.s32.totalorder %s29, 7
      %p347 = por %p345, %p346
      %p348 = scmp.ne.s32.totalorder %s339, %s340
      %p349 = scmp.eq.s32.totalorder %s29, 0
      %p350 = por %p348, %p349
      %p351 = scmp.ne.s32.totalorder %s339, %s340
      %p352 = scmp.eq.s32.totalorder %s30, 7
      %p353 = por %p351, %p352
      %p355 = scmp.ne.s32.totalorder %s340, %s354
      %p356 = scmp.eq.s32.totalorder %s30, 0
      %p357 = por %p355, %p356
      %s359 = sadd.s32 %s358, 1
      %p362 = scmp.eq.s32.totalorder %s24, 7
      %p363 = scmp.ne.s32.totalorder %s358, %s360
      %p364 = scmp.eq.s32.totalorder %s24, 0
      %p365 = por %p363, %p364
      %p366 = scmp.ne.s32.totalorder %s358, %s360
      %p367 = scmp.eq.s32.totalorder %s29, 7
      %p368 = por %p366, %p367
      %p369 = scmp.ne.s32.totalorder %s360, %s361
      %p370 = scmp.eq.s32.totalorder %s29, 0
      %p371 = por %p369, %p370
      %p372 = scmp.ne.s32.totalorder %s360, %s361
      %p373 = scmp.eq.s32.totalorder %s30, 7
      %p374 = por %p372, %p373
      %p376 = scmp.ne.s32.totalorder %s361, %s375
      %p377 = scmp.eq.s32.totalorder %s30, 0
      %p378 = por %p376, %p377
      %s379 = ssub.s32 %s31, %s43
      %p380 = scmp.eq.s32.totalorder %s379, 0
      %s382 = sadd.s32 %s381, 1
      %s383 = scalar_select %p380, %s381, %s382
      %p386 = pneg %p380
      %p387 = scmp.eq.s32.totalorder %s24, 7
      %p388 = por %p386, %p387
      %p389 = scmp.ne.s32.totalorder %s381, %s384
      %p390 = scmp.eq.s32.totalorder %s24, 0
      %p391 = por %p389, %p390
      %p392 = scmp.ne.s32.totalorder %s381, %s384
      %p393 = scmp.eq.s32.totalorder %s29, 7
      %p394 = por %p392, %p393
      %p395 = scmp.ne.s32.totalorder %s384, %s385
      %p396 = scmp.eq.s32.totalorder %s29, 0
      %p397 = por %p395, %p396
      %p398 = scmp.ne.s32.totalorder %s384, %s385
      %p399 = scmp.eq.s32.totalorder %s30, 7
      %p400 = por %p398, %p399
      %p402 = scmp.ne.s32.totalorder %s385, %s401
      %p403 = scmp.eq.s32.totalorder %s30, 0
      %p404 = por %p402, %p403
      %p405 = scmp.le.s32.totalorder 1, %s24
      %p406 = scmp.lt.s32.totalorder %s24, 9
      %p407 = pnand %p405, %p406
      %p408 = pneg %p407
      // Predicated region
      $region9: #{tpu_custom_call.1} parent=5 // pred_check
        _
      $region10: #{tpu_custom_call.1} parent=5 // pred_check_branch
        %410 = sbr.rel (%p407) target = $region12
      $region11: #{tpu_custom_call.1} parent=5 // pred_region
        %s411 = ssub.s32 %s24, 1
        // Predicated region
        $region13: #{tpu_custom_call.1} parent=11 // pred_check
          %p412 = pneg %p161
        $region14: #{tpu_custom_call.1} parent=11 // pred_check_branch
          %414 = sbr.rel (%p412) target = $region16
        $region15: #{tpu_custom_call.1} parent=11 // pred_region
          _
        $region16: #{tpu_custom_call.1} parent=11 // pred_fallthru
          _
        // Predicated region
        $region17: #{tpu_custom_call.1} parent=11 // pred_check
          %p415 = pneg %p182
        $region18: #{tpu_custom_call.1} parent=11 // pred_check_branch
          %417 = sbr.rel (%p415) target = $region20
        $region19: #{tpu_custom_call.1} parent=11 // pred_region
          _
        $region20: #{tpu_custom_call.1} parent=11 // pred_fallthru
          _
        // Predicated region
        $region21: #{tpu_custom_call.1} parent=11 // pred_check
          %p418 = pneg %p203
        $region22: #{tpu_custom_call.1} parent=11 // pred_check_branch
          %420 = sbr.rel (%p418) target = $region24
        $region23: #{tpu_custom_call.1} parent=11 // pred_region
          _
        $region24: #{tpu_custom_call.1} parent=11 // pred_fallthru
          _
        // Predicated region
        $region25: #{tpu_custom_call.1} parent=11 // pred_check
          %p421 = pneg %p224
        $region26: #{tpu_custom_call.1} parent=11 // pred_check_branch
          %423 = sbr.rel (%p421) target = $region28
        $region27: #{tpu_custom_call.1} parent=11 // pred_region
          _
        $region28: #{tpu_custom_call.1} parent=11 // pred_fallthru
          _
        // Predicated region
        $region29: #{tpu_custom_call.1} parent=11 // pred_check
          %p424 = pneg %p245
        $region30: #{tpu_custom_call.1} parent=11 // pred_check_branch
          %426 = sbr.rel (%p424) target = $region32
        $region31: #{tpu_custom_call.1} parent=11 // pred_region
          _
        $region32: #{tpu_custom_call.1} parent=11 // pred_fallthru
          _
        // Predicated region
        $region33: #{tpu_custom_call.1} parent=11 // pred_check
          %p427 = pneg %p266
        $region34: #{tpu_custom_call.1} parent=11 // pred_check_branch
          %429 = sbr.rel (%p427) target = $region36
        $region35: #{tpu_custom_call.1} parent=11 // pred_region
          _
        $region36: #{tpu_custom_call.1} parent=11 // pred_fallthru
          _
        // Predicated region
        $region37: #{tpu_custom_call.1} parent=11 // pred_check
          %p430 = pneg %p287
        $region38: #{tpu_custom_call.1} parent=11 // pred_check_branch
          %432 = sbr.rel (%p430) target = $region40
        $region39: #{tpu_custom_call.1} parent=11 // pred_region
          _
        $region40: #{tpu_custom_call.1} parent=11 // pred_fallthru
          _
        // Predicated region
        $region41: #{tpu_custom_call.1} parent=11 // pred_check
          %p433 = pneg %p308
        $region42: #{tpu_custom_call.1} parent=11 // pred_check_branch
          %435 = sbr.rel (%p433) target = $region44
        $region43: #{tpu_custom_call.1} parent=11 // pred_region
          _
        $region44: #{tpu_custom_call.1} parent=11 // pred_fallthru
          _
        // Predicated region
        $region45: #{tpu_custom_call.1} parent=11 // pred_check
          %p436 = pneg %p329
        $region46: #{tpu_custom_call.1} parent=11 // pred_check_branch
          %438 = sbr.rel (%p436) target = $region48
        $region47: #{tpu_custom_call.1} parent=11 // pred_region
          _
        $region48: #{tpu_custom_call.1} parent=11 // pred_fallthru
          _
        // Predicated region
        $region49: #{tpu_custom_call.1} parent=11 // pred_check
          %p439 = pneg %p350
        $region50: #{tpu_custom_call.1} parent=11 // pred_check_branch
          %441 = sbr.rel (%p439) target = $region52
        $region51: #{tpu_custom_call.1} parent=11 // pred_region
          _
        $region52: #{tpu_custom_call.1} parent=11 // pred_fallthru
          _
        // Predicated region
        $region53: #{tpu_custom_call.1} parent=11 // pred_check
          %p442 = pneg %p371
        $region54: #{tpu_custom_call.1} parent=11 // pred_check_branch
          %444 = sbr.rel (%p442) target = $region56
        $region55: #{tpu_custom_call.1} parent=11 // pred_region
          _
        $region56: #{tpu_custom_call.1} parent=11 // pred_fallthru
          _
      $region12: #{tpu_custom_call.1} parent=5 // pred_fallthru
        _
      %p445 = scmp.lt.s32.totalorder %s24, 8
      // Predicated region
      $region57: #{tpu_custom_call.1} parent=5 // pred_check
        %p446 = pneg %p445
      $region58: #{tpu_custom_call.1} parent=5 // pred_check_branch
        %448 = sbr.rel (%p446) target = $region60
      $region59: #{tpu_custom_call.1} parent=5 // pred_region
        // Predicated region
        $region61: #{tpu_custom_call.1} parent=59 // pred_check
          %p449 = pneg %p56
        $region62: #{tpu_custom_call.1} parent=59 // pred_check_branch
          %451 = sbr.rel (%p449) target = $region64
        $region63: #{tpu_custom_call.1} parent=59 // pred_region
          %p452 = scmp.lt.s32.totalorder %s31, 1
          %s453 = scalar_select %p452, %s31, 1
          %s454 = smul.addr %s453, 8
          %s455 = scalar_lea.vmem %s0, %s454
        $region64: #{tpu_custom_call.1} parent=59 // pred_fallthru
          _
        // Predicated region
        $region65: #{tpu_custom_call.1} parent=59 // pred_check
          %p456 = pneg %p82
        $region66: #{tpu_custom_call.1} parent=59 // pred_check_branch
          %458 = sbr.rel (%p456) target = $region68
        $region67: #{tpu_custom_call.1} parent=59 // pred_region
          %p459 = scmp.lt.s32.totalorder %s32, 3
          %s460 = scalar_select %p459, %s32, 3
          %s461 = smul.addr %s460, 4
          %s462 = smul.addr %s461, 4
          %s463 = scalar_lea.vmem %s1, %s462
        $region68: #{tpu_custom_call.1} parent=59 // pred_fallthru
          _
        // Predicated region
        $region69: #{tpu_custom_call.1} parent=59 // pred_check
          %p464 = pneg %p108
        $region70: #{tpu_custom_call.1} parent=59 // pred_check_branch
          %466 = sbr.rel (%p464) target = $region72
        $region71: #{tpu_custom_call.1} parent=59 // pred_region
          %p467 = scmp.lt.s32.totalorder %s32, 3
          %s468 = scalar_select %p467, %s32, 3
          %s469 = scalar_lea.vmem %s2, %s468
        $region72: #{tpu_custom_call.1} parent=59 // pred_fallthru
          _
        // Predicated region
        $region73: #{tpu_custom_call.1} parent=59 // pred_check
          %p470 = pneg %p134
        $region74: #{tpu_custom_call.1} parent=59 // pred_check_branch
          %472 = sbr.rel (%p470) target = $region76
        $region75: #{tpu_custom_call.1} parent=59 // pred_region
          %p473 = scmp.lt.s32.totalorder %s32, 3
          %s474 = scalar_select %p473, %s32, 3
          %s475 = smul.addr %s474, 4
          %s476 = scalar_lea.vmem %s3, %s475
        $region76: #{tpu_custom_call.1} parent=59 // pred_fallthru
          _
      $region60: #{tpu_custom_call.1} parent=5 // pred_fallthru
        _
      %p477 = scmp.le.s32.totalorder 1, %s24
      %p478 = scmp.lt.s32.totalorder %s24, 9
      %p479 = pnand %p477, %p478
      %p480 = pneg %p479
      // Predicated region
      $region77: #{tpu_custom_call.1} parent=5 // pred_check
        _
      $region78: #{tpu_custom_call.1} parent=5 // pred_check_branch
        %482 = sbr.rel (%p479) target = $region80
      $region79: #{tpu_custom_call.1} parent=5 // pred_region
        %s483 = ssub.s32 %s24, 1
        %p484 = scmp.lt.s32.totalorder %s33, 1
        %s485 = scalar_select %p484, %s33, 1
        %s486 = smul.addr %s485, 8
        %s487 = scalar_lea.vmem %s0, %s486
        %p488 = pneg %p62
        %p489 = pneg %p59
        %p490 = scmp.lt.s32.totalorder %s34, 3
        %s491 = scalar_select %p490, %s34, 3
        %s492 = smul.addr %s491, 4
        %s493 = smul.addr %s492, 4
        %s494 = scalar_lea.vmem %s1, %s493
        %p495 = pneg %p88
        %p496 = pneg %p85
        %p497 = scmp.lt.s32.totalorder %s34, 3
        %s498 = scalar_select %p497, %s34, 3
        %s499 = scalar_lea.vmem %s2, %s498
        %p500 = pneg %p114
        %p501 = pneg %p111
        %p502 = scmp.lt.s32.totalorder %s34, 3
        %s503 = scalar_select %p502, %s34, 3
        %s504 = smul.addr %s503, 4
        %s505 = scalar_lea.vmem %s3, %s504
        %p506 = pneg %p140
        %p507 = pneg %p137
        %p508 = pneg %p161
        %p509 = pneg %p158
        %p510 = pneg %p182
        %p511 = pneg %p179
        %p512 = pneg %p203
        %p513 = pneg %p200
        %p514 = pneg %p224
        %p515 = pneg %p221
        %p516 = pneg %p245
        %p517 = pneg %p242
        %p518 = pneg %p266
        %p519 = pneg %p263
        %p520 = pneg %p287
        %p521 = pneg %p284
        %p522 = pneg %p308
        %p523 = pneg %p305
        %p524 = pneg %p329
        %p525 = pneg %p326
        %p526 = pneg %p350
        %p527 = pneg %p347
        %p528 = pneg %p371
        %p529 = pneg %p368
        %p530 = pneg %p397
        %p531 = pneg %p394
        %s532 = sand.u32 %s384, 1
        %s533 = scalar_lea.sflag [#allocation4], %s532
        %s534 = sand.u32 %s384, 1
        %s535 = smul.addr %s534, 8
        %s536 = scalar_lea.vmem [#allocation3], %s535
        %p537 = scmp.lt.s32.totalorder %s33, 1
        %s538 = scalar_select %p537, %s33, 1
        %s539 = smul.addr %s538, 8
        %s540 = scalar_lea.vmem %s0, %s539
        %p541 = scmp.lt.s32.totalorder %s34, 3
        %s542 = scalar_select %p541, %s34, 3
        %s543 = smul.addr %s542, 4
        %s544 = smul.addr %s543, 4
        %s545 = scalar_lea.vmem %s1, %s544
        %p546 = scmp.lt.s32.totalorder %s34, 3
        %s547 = scalar_select %p546, %s34, 3
        %s548 = scalar_lea.vmem %s2, %s547
        %p549 = scmp.lt.s32.totalorder %s34, 3
        %s550 = scalar_select %p549, %s34, 3
        %s551 = smul.addr %s550, 4
        %s552 = scalar_lea.vmem %s3, %s551
        %v554 = vld [vmem:[%s540] sm:$0xff]
        %v555 = vpack.c.bf16 %v554, %v554
        %v556 = vld [vmem:[%s545] sm:$0xf]
        %v557 = vld [vmem:[%s545 + $0x4] sm:$0xf]
        %v558 = vld [vmem:[%s545 + $0x8] sm:$0xf]
        %v559 = vld [vmem:[%s545 + $0xc] sm:$0xf]
        %v560 = vld [vmem:[%s548] sm:$0x1]
        %v562 = vperm.slane %v560, 0
        %v568 = vunpack.c.l.b16 %v556
        %v569 = vunpack.c.l.b16 %v557
        %v570 = vunpack.c.l.b16 %v558
        %v571 = vunpack.c.l.b16 %v559
        %v572 = vpack.c.b16 %v569, %v568
        %v573 = vpack.c.b16 %v571, %v570
        %vm576 = vcmask 261120
        %v578 = vsel %vm576, %v555, 0
        %580 = vmatpush.bf16.msra.mxu0 0
        %581 = vmatpush.bf16.msra.mxu0 0
        %582 = vmatpush.bf16.msra.mxu0 0
        %583 = vmatpush.bf16.msra.mxu0 0
        %584 = vmatpush.bf16.msra.mxu0 0
        %585 = vmatpush.bf16.msra.mxu0 0
        %586 = vmatpush.bf16.msra.mxu0 %v573
        %587 = vmatpush.bf16.msra.mxu0 %v572
        %588 = vmatmul.bf16.gmra.mxu0 %v578
        %v589 = vpop.f32.mrf.mxu0
        %v590 = vadd.f32 %v562, %v589
        %v591 = vpop.f32.mrf.mxu0
        %592 = vdwg.mxu0
        %v593 = vpack.c.bf16 %v590, %v590
        %595 = vrot.lane.b32.xlu0 %v593, 120
        %v596 = vpop.permute.xlu0 %595
        %vm597 = vcmask 64512
        %v599 = vsel %vm597, %v593, 0
        %v602 = vsel %vm597, %v596, 0
        %604 = vmatpush.bf16.xpose.msra.mxu0 0
        %605 = vmatpush.bf16.xpose.msra.mxu0 0
        %606 = vmatpush.bf16.xpose.msra.mxu0 0
        %607 = vmatpush.bf16.xpose.msra.mxu0 0
        %608 = vmatpush.bf16.xpose.msra.mxu0 0
        %609 = vmatpush.bf16.xpose.msra.mxu0 0
        %610 = vmatpush.bf16.xpose.msra.mxu0 0
        %611 = vmatpush.bf16.xpose.msra.mxu0 %v602
        %612 = vmatmul.bf16.gmra.mxu0 %v599
        %v613 = vpop.f32.mrf.mxu0
        %v614 = vadd.f32 0.0, %v613
        %v615 = vpop.f32.mrf.mxu0
        %616 = vdwg.mxu0
        %v617 = vsel %vm597, %v614, -inf
        %618 = vmax.xlane.f32.xlu0 %v617
        %v619 = vpop.xlane.xlu0 %618
        %v620 = vsub.f32 %v614, %v619
        %v621 = vmul.f32 %v620, 1.442695
        %v622 = vpow.pop %v621
        %v623 = vsel %vm597, %v622, 0.0
        %624 = vadd.xlane.f32.xlu0 %v623
        %v625 = vpop.xlane.xlu0 %624
        %v626 = vrcp.pop %v625
        %v627 = vpack.c.bf16 %v622, %v622
        %628 = vrot.lane.b32.xlu0 %v593, 112
        %v629 = vpop.permute.xlu0 %628
        %v631 = vsel %vm597, %v627, 0
        %vm633 = vcmask 1043456
        %v635 = vsel %vm633, %v629, 0
        %637 = vmatpush.bf16.msra.mxu0 0
        %638 = vmatpush.bf16.msra.mxu0 0
        %639 = vmatpush.bf16.msra.mxu0 0
        %640 = vmatpush.bf16.msra.mxu0 0
        %641 = vmatpush.bf16.msra.mxu0 0
        %642 = vmatpush.bf16.msra.mxu0 0
        %643 = vmatpush.bf16.msra.mxu0 0
        %644 = vmatpush.bf16.msra.mxu0 %v635
        %645 = vmatmul.bf16.gmra.mxu0 %v631
        %v646 = vpop.f32.mrf.mxu0
        %v647 = vadd.f32 0.0, %v646
        %v648 = vpop.f32.mrf.mxu0
        %649 = vdwg.mxu0
        %v650 = vmul.f32 %v647, %v626
        %p651 = scmp.eq.s32.totalorder %s34, 0
        // Predicated region
        $region81: #{tpu_custom_call.1} parent=79 // pred_check
          %p652 = pneg %p651
        $region82: #{tpu_custom_call.1} parent=79 // pred_check_branch
          %654 = sbr.rel (%p652) target = $region84
        $region83: #{tpu_custom_call.1} parent=79 // pred_region
          %655 = vst.msk [vmem:[#allocation2] sm:$0xff] %vm576, 0.0
        $region84: #{tpu_custom_call.1} parent=79 // pred_fallthru
          _
        %v656 = vld [vmem:[#allocation2] sm:$0xff]
        %v657 = vpack.c.bf16 %v650, %v650
        %v658 = vld [vmem:[%s552] sm:$0xf]
        %v660 = vsel %vm597, %v657, 0
        %v663 = vsel %vm633, %v658, 0
        %665 = vmatpush.bf16.msra.mxu0 0
        %666 = vmatpush.bf16.msra.mxu0 0
        %667 = vmatpush.bf16.msra.mxu0 0
        %668 = vmatpush.bf16.msra.mxu0 0
        %669 = vmatpush.bf16.msra.mxu0 0
        %670 = vmatpush.bf16.msra.mxu0 0
        %671 = vmatpush.bf16.msra.mxu0 0
        %672 = vmatpush.bf16.msra.mxu0 %v663
        %673 = vmatmul.bf16.gmra.mxu0 %v660
        %v674 = vpop.f32.mrf.mxu0
        %v675 = vadd.f32 0.0, %v674
        %v676 = vpop.f32.mrf.mxu0
        %677 = vdwg.mxu0
        %v678 = vadd.f32 %v656, %v675
        %679 = vst.msk [vmem:[#allocation2] sm:$0xff] %vm576, %v678
        %p680 = scmp.eq.s32.totalorder %s34, 3
        // Predicated region
        $region85: #{tpu_custom_call.1} parent=79 // pred_check
          %p681 = pneg %p680
        $region86: #{tpu_custom_call.1} parent=79 // pred_check_branch
          %683 = sbr.rel (%p681) target = $region88
        $region87: #{tpu_custom_call.1} parent=79 // pred_region
          %v684 = vld [vmem:[#allocation2] sm:$0xff]
          %v685 = vld [vmem:[%s4] sm:$0x1]
          %v687 = vperm.slane %v685, 0
          %v689 = vadd.f32 %v684, %v687
          %v690 = vld [vmem:[%s5] sm:$0x1]
          %v691 = vld [vmem:[%s6] sm:$0x1]
          %v692 = vsel %vm576, %v689, 0.0
          %693 = vadd.xlane.f32.xlu0 %v692
          %v694 = vpop.xlane.xlu0 %693
          %v695 = vrcp.pop 32.0
          %v696 = vmul.f32 32.0, %v695
          %v697 = vsub.f32 1.0, %v696
          %v698 = vmul.f32 %v695, %v697
          %v699 = vadd.f32 %v695, %v698
          %vm700 = vweird.f32 %v695
          %v701 = vsel %vm700, %v695, %v699
          %v702 = vmul.f32 %v694, %v701
          %v703 = vsub.f32 %v689, %v702
          %v704 = vmul.f32 %v703, %v703
          %v705 = vsel %vm576, %v704, 0.0
          %706 = vadd.xlane.f32.xlu0 %v705
          %v707 = vpop.xlane.xlu0 %706
          %v708 = vmul.f32 %v707, %v701
          %v709 = vadd.f32 %v708, 1e-05
          %v710 = vrsqrt.pop %v709
          %v711 = vmul.f32 %v710, %v709
          %v712 = vmul.f32 %v711, %v710
          %v713 = vmul.f32 0.5, %v712
          %v714 = vsub.f32 1.5, %v713
          %v715 = vmul.f32 %v710, %v714
          %vm716 = vweird.f32 %v709
          %vm717 = vweird.f32 %v710
          %vm718 = vmor %vm716, %vm717
          %v719 = vsel %vm718, %v710, %v715
          %v720 = vmul.f32 %v703, %v719
          %v722 = vperm.slane %v690, 0
          %v724 = vmul.f32 %v720, %v722
          %v726 = vperm.slane %v691, 0
          %v728 = vadd.f32 %v724, %v726
          %v729 = vadd.f32 %v554, %v728
          %v730 = vld [vmem:[%s7] sm:$0x1]
          %v731 = vld [vmem:[%s8] sm:$0x1]
          %v732 = vsel %vm576, %v729, 0.0
          %733 = vadd.xlane.f32.xlu0 %v732
          %v734 = vpop.xlane.xlu0 %733
          %v735 = vmul.f32 %v734, %v701
          %v736 = vsub.f32 %v729, %v735
          %v737 = vmul.f32 %v736, %v736
          %v738 = vsel %vm576, %v737, 0.0
          %739 = vadd.xlane.f32.xlu0 %v738
          %v740 = vpop.xlane.xlu0 %739
          %v741 = vmul.f32 %v740, %v701
          %v742 = vadd.f32 %v741, 1e-05
          %v743 = vrsqrt.pop %v742
          %v744 = vmul.f32 %v743, %v742
          %v745 = vmul.f32 %v744, %v743
          %v746 = vmul.f32 0.5, %v745
          %v747 = vsub.f32 1.5, %v746
          %v748 = vmul.f32 %v743, %v747
          %vm749 = vweird.f32 %v742
          %vm750 = vweird.f32 %v743
          %vm751 = vmor %vm749, %vm750
          %v752 = vsel %vm751, %v743, %v748
          %v753 = vmul.f32 %v736, %v752
          %v755 = vperm.slane %v730, 0
          %v757 = vmul.f32 %v753, %v755
          %v759 = vperm.slane %v731, 0
          %v761 = vadd.f32 %v757, %v759
          %v762 = vpack.c.bf16 %v761, %v761
          %v763 = vld [vmem:[%s9] sm:$0xf]
          %v764 = vld [vmem:[%s9 + $0x4] sm:$0xf]
          %v765 = vld [vmem:[%s9 + $0x8] sm:$0xf]
          %v766 = vld [vmem:[%s9 + $0xc] sm:$0xf]
          %v767 = vld [vmem:[%s10] sm:$0x1]
          %v769 = vperm.slane %v767, 0
          %v775 = vunpack.c.l.b16 %v763
          %v776 = vunpack.c.l.b16 %v764
          %v777 = vunpack.c.l.b16 %v765
          %v778 = vunpack.c.l.b16 %v766
          %v779 = vpack.c.b16 %v776, %v775
          %v780 = vpack.c.b16 %v778, %v777
          %v784 = vsel %vm576, %v762, 0
          %786 = vmatpush.bf16.msra.mxu0 0
          %787 = vmatpush.bf16.msra.mxu0 0
          %788 = vmatpush.bf16.msra.mxu0 0
          %789 = vmatpush.bf16.msra.mxu0 0
          %790 = vmatpush.bf16.msra.mxu0 0
          %791 = vmatpush.bf16.msra.mxu0 0
          %792 = vmatpush.bf16.msra.mxu0 %v780
          %793 = vmatpush.bf16.msra.mxu0 %v779
          %794 = vmatmul.bf16.gmra.mxu0 %v784
          %v795 = vpop.f32.mrf.mxu0
          %v796 = vadd.f32 %v769, %v795
          %v797 = vpop.f32.mrf.mxu0
          %798 = vdwg.mxu0
          %v799 = vmax.f32 %v796, 0.0
          %v800 = vpack.c.bf16 %v799, %v799
          %v801 = vld [vmem:[%s11] sm:$0xf]
          %v802 = vld [vmem:[%s11 + $0x4] sm:$0xf]
          %v803 = vld [vmem:[%s11 + $0x8] sm:$0xf]
          %v804 = vld [vmem:[%s11 + $0xc] sm:$0xf]
          %v805 = vld [vmem:[%s11 + $0x10] sm:$0xf]
          %v806 = vld [vmem:[%s11 + $0x14] sm:$0xf]
          %v807 = vld [vmem:[%s11 + $0x18] sm:$0xf]
          %v808 = vld [vmem:[%s11 + $0x1c] sm:$0xf]
          %v809 = vld [vmem:[%s12] sm:$0x1]
          %v811 = vperm.slane %v809, 0
          %v821 = vunpack.c.l.b16 %v801
          %v822 = vunpack.c.l.b16 %v802
          %v823 = vunpack.c.l.b16 %v803
          %v824 = vunpack.c.l.b16 %v804
          %v825 = vunpack.c.l.b16 %v805
          %v826 = vunpack.c.l.b16 %v806
          %v827 = vunpack.c.l.b16 %v807
          %v828 = vunpack.c.l.b16 %v808
          %v829 = vpack.c.b16 %v822, %v821
          %v830 = vpack.c.b16 %v824, %v823
          %v831 = vpack.c.b16 %v826, %v825
          %v832 = vpack.c.b16 %v828, %v827
          %vm837 = vcmask 523264
          %v839 = vsel %vm837, %v800, 0
          %841 = vmatpush.bf16.msra.mxu0 0
          %842 = vmatpush.bf16.msra.mxu0 0
          %843 = vmatpush.bf16.msra.mxu0 0
          %844 = vmatpush.bf16.msra.mxu0 0
          %845 = vmatpush.bf16.msra.mxu0 %v832
          %846 = vmatpush.bf16.msra.mxu0 %v831
          %847 = vmatpush.bf16.msra.mxu0 %v830
          %848 = vmatpush.bf16.msra.mxu0 %v829
          %849 = vmatmul.bf16.gmra.mxu0 %v839
          %v850 = vpop.f32.mrf.mxu0
          %v851 = vadd.f32 %v811, %v850
          %v852 = vpop.f32.mrf.mxu0
          %853 = vdwg.mxu0
          %v854 = vadd.f32 %v761, %v851
          %v855 = vld [vmem:[%s13] sm:$0x1]
          %v856 = vld [vmem:[%s14] sm:$0x1]
          %v857 = vsel %vm576, %v854, 0.0
          %858 = vadd.xlane.f32.xlu0 %v857
          %v859 = vpop.xlane.xlu0 %858
          %v860 = vmul.f32 %v859, %v701
          %v861 = vsub.f32 %v854, %v860
          %v862 = vmul.f32 %v861, %v861
          %v863 = vsel %vm576, %v862, 0.0
          %864 = vadd.xlane.f32.xlu0 %v863
          %v865 = vpop.xlane.xlu0 %864
          %v866 = vmul.f32 %v865, %v701
          %v867 = vadd.f32 %v866, 1e-05
          %v868 = vrsqrt.pop %v867
          %v869 = vmul.f32 %v868, %v867
          %v870 = vmul.f32 %v869, %v868
          %v871 = vmul.f32 0.5, %v870
          %v872 = vsub.f32 1.5, %v871
          %v873 = vmul.f32 %v868, %v872
          %vm874 = vweird.f32 %v867
          %vm875 = vweird.f32 %v868
          %vm876 = vmor %vm874, %vm875
          %v877 = vsel %vm876, %v868, %v873
          %v878 = vmul.f32 %v861, %v877
          %v880 = vperm.slane %v855, 0
          %v882 = vmul.f32 %v878, %v880
          %v884 = vperm.slane %v856, 0
          %v886 = vadd.f32 %v882, %v884
          %887 = vst.msk [vmem:[%s536] sm:$0xff] %vm576, %v886
        $region88: #{tpu_custom_call.1} parent=79 // pred_fallthru
          _
        %s888 = sand.u32 %s384, 1
        %s889 = scalar_lea.sflag [#allocation4], %s888
        %s890 = sand.u32 %s384, 1
        %s891 = smul.addr %s890, 8
        %s892 = scalar_lea.vmem [#allocation3], %s891
        // Predicated region
        $region89: #{tpu_custom_call.1} parent=79 // pred_check
          %p893 = pneg %p394
        $region90: #{tpu_custom_call.1} parent=79 // pred_check_branch
          %895 = sbr.rel (%p893) target = $region92
        $region91: #{tpu_custom_call.1} parent=79 // pred_region
          %897 = vsyncadd %s889, 0
          %s898 = smul.addr %s33, 8
          %s899 = scalar_lea.hbm %s15, %s898
          %s901 = sshll.u32 %s892, 4
          %s902 = int_to_ptr.vmem [resolvable:$true] %s901
          %s903 = sshll.u32 %s899, 4
          %s904 = int_to_ptr.hbm [resolvable:$true] %s903
          %906 = dma.vmem_to_hbm [thread:$0]  %s902, 128, %s904, %s889
        $region92: #{tpu_custom_call.1} parent=79 // pred_fallthru
          _
      $region80: #{tpu_custom_call.1} parent=5 // pred_fallthru
        _
      %p907 = scmp.le.s32.totalorder 2, %s24
      // Predicated region
      $region93: #{tpu_custom_call.1} parent=5 // pred_check
        %p908 = pneg %p907
      $region94: #{tpu_custom_call.1} parent=5 // pred_check_branch
        %910 = sbr.rel (%p908) target = $region96
      $region95: #{tpu_custom_call.1} parent=5 // pred_region
        %s911 = ssub.s32 %s24, 2
        // Predicated region
        $region97: #{tpu_custom_call.1} parent=95 // pred_check
          %p912 = pneg %p400
        $region98: #{tpu_custom_call.1} parent=95 // pred_check_branch
          %914 = sbr.rel (%p912) target = $region100
        $region99: #{tpu_custom_call.1} parent=95 // pred_region
          %s915 = sand.u32 %s385, 1
          %s916 = scalar_lea.sflag [#allocation4], %s915
          %s917 = sand.u32 %s385, 1
          %s918 = smul.addr %s917, 8
          %s919 = scalar_lea.vmem [#allocation3], %s918
          %921 = dma.done %s916, 128
        $region100: #{tpu_custom_call.1} parent=95 // pred_fallthru
          _
      $region96: #{tpu_custom_call.1} parent=5 // pred_fallthru
        _
    $region6: #{tpu_custom_call.1} parent=1 // loop_footer
      %s28 = sadd.s32 1, %s24
    $region7: #{tpu_custom_call.1} parent=1 // loop_footer_branch
      %23 = sbr.rel target = $region3
    $region8: #{tpu_custom_call.1} parent=1 // loop_exit
      _
    %922 = vsyncpa [#allocation4], 1
    %s923 = scalar_lea.sflag [#allocation4], 1
    %924 = vsyncpa %s923, 1

</llo_original>
